<compile_context>
chip_gen: v7x
topology: tpu7x:2x2x1
jax: 0.10.0
libtpu: 0.0.40
codegen_flags: <defaults>
</compile_context>

<pallas_src>
import math

import jax
import jax.numpy as jnp
from jax.experimental import pallas as pl
from jax.experimental.pallas import tpu as pltpu

_LANES = 128          # vreg lane width — last dim of the slab
_SUBLANES = 8         # f32 sublane tiling — row counts kept a multiple of 8
_MAX_TILE_ROWS = 512  # 512*128*4B = 256 KiB per f32 block; x2 (in/out) x2
                      # (double-buffer) = 1 MiB VMEM -> safe on v5e/v6e/v7x


def _copy_kernel(x_ref, o_ref):
    # Lane-dense, full-width tile copy: unmasked vld/vst, pipelined by
    # BlockSpec (prefetch tile i+1 while tile i streams out).
    o_ref[...] = x_ref[...]


def _cdiv(a, b):
    return -(-a // b)


def _resolve_shape(total, shape):
    """torch.view semantics: at most one -1, total element count must match."""
    shape = list(shape)
    neg = [i for i, s in enumerate(shape) if s == -1]
    if len(neg) > 1:
        raise ValueError("only one dimension may be -1 in view()")
    if neg:
        known = 1
        for s in shape:
            if s != -1:
                known *= s
        if known == 0 or total % known != 0:
            raise ValueError(f"cannot view {total} elements as {tuple(shape)}")
        shape[neg[0]] = total // known
    if math.prod(shape) != total:
        raise ValueError(f"cannot view {total} elements as {tuple(shape)}")
    return tuple(shape)


def reshape_forward(x, shape):
    """Pallas equivalent of `x.view(shape)` for a contiguous (row-major) x."""
    total = math.prod(x.shape) if x.ndim > 0 else 1
    out_shape = _resolve_shape(total, shape)

    # Present the data as a lane-dense (rows, 128) slab.  Round rows up to a
    # multiple of 8 (f32 sublane tile) and to a multiple of the row-tile so
    # the grid divides evenly -> no masked partial stores, no ragged blocks.
    rows = _cdiv(total, _LANES)
    rows = _cdiv(rows, _SUBLANES) * _SUBLANES
    tile_rows = min(rows, _MAX_TILE_ROWS)
    rows = _cdiv(rows, tile_rows) * tile_rows
    padded_total = rows * _LANES

    flat = x.reshape(-1)
    if padded_total != total:
        flat = jnp.concatenate(
            [flat, jnp.zeros((padded_total - total,), dtype=x.dtype)]
        )
    flat2d = flat.reshape(rows, _LANES)

    out_flat = pl.pallas_call(
        _copy_kernel,
        out_shape=jax.ShapeDtypeStruct((rows, _LANES), x.dtype),
        grid=(rows // tile_rows,),
        in_specs=[pl.BlockSpec((tile_rows, _LANES), lambda i: (i, 0))],
        out_specs=pl.BlockSpec((tile_rows, _LANES), lambda i: (i, 0)),
        compiler_params=pltpu.CompilerParams(
            # Independent row tiles: lets the two v7x TensorCores each stream
            # half the data; harmless no-op on single-TC v5e/v6e.
            dimension_semantics=("parallel",),
            # Explicit, v7x-safe scoped-VMEM budget (64 MiB physical there).
            vmem_limit_bytes=32 * 1024 * 1024,
        ),
    )(flat2d)

    # Strip padding and apply the target view (pure metadata at this point).
    return out_flat.reshape(-1)[:total].reshape(out_shape)


class Reshape:
    """Thin mirror of the PyTorch module: Reshape(*shape)(x) == x.view(shape)."""

    def __init__(self, *shape):
        self.shape = shape

    def __call__(self, x):
        return reshape_forward(x, self.shape)


if __name__ == "__main__":
    key = jax.random.PRNGKey(0)

    # Case 1: (2, 4, 16, 16) -> view as (2, 4, 256); 2048 elems, tile-aligned.
    x = jax.random.normal(key, (2, 4, 16, 16), dtype=jnp.float32)
    module = Reshape(2, 4, 256)
    out = jax.block_until_ready(module(x))
    ref = jnp.reshape(x, (2, 4, 256))
    assert out.shape == ref.shape and out.dtype == ref.dtype
    assert jnp.array_equal(out, ref), "mismatch vs reference (case 1)"

    # Case 2: non-tile-multiple size + a -1 dim, exercising the padded path.
    x2 = jax.random.normal(jax.random.PRNGKey(1), (3, 5, 7), dtype=jnp.float32)
    out2 = jax.block_until_ready(Reshape(5, -1)(x2))
    ref2 = jnp.reshape(x2, (5, 21))
    assert out2.shape == ref2.shape
    assert jnp.array_equal(out2, ref2), "mismatch vs reference (case 2)"

    print("KERNEL_OK")
</pallas_src>

<mosaic_0001>
module attributes {stable_mosaic.version = 11 : i64} {
  func.func @_copy_kernel(%arg0: i32, %arg1: memref<16x128xf32, #tpu.memory_space<vmem>>, %arg2: memref<16x128xf32, #tpu.memory_space<vmem>>) attributes {dimension_semantics = [#tpu.dimension_semantics<parallel>], iteration_bounds = array<i64: 1>, scalar_prefetch = 0 : i64, scratch_operands = 0 : i64, tpu.core_type = #tpu.core_type<tc>, window_params = [{transform_indices = @transform_0, window_bounds = array<i64: 16, 128>}, {transform_indices = @transform_1, window_bounds = array<i64: 16, 128>}]} {
    %c0 = arith.constant 0 : index
    %c0_0 = arith.constant 0 : index
    %0 = vector.load %arg1[%c0, %c0_0] : memref<16x128xf32, #tpu.memory_space<vmem>>, vector<16x128xf32>
    %c0_1 = arith.constant 0 : index
    %c0_2 = arith.constant 0 : index
    %1 = vector.load %arg2[%c0_1, %c0_2] : memref<16x128xf32, #tpu.memory_space<vmem>>, vector<16x128xf32>
    tpu.vector_store %arg2[%c0_1, %c0_2], %0 {strides = array<i32>} : memref<16x128xf32, #tpu.memory_space<vmem>>, vector<16x128xf32>,
    return
  }
  func.func @transform_0(%arg0: i32) -> (i32, i32) {
    %c0_i32 = arith.constant 0 : i32
    %c0_i32_0 = arith.constant 0 : i32
    return %arg0, %c0_i32 : i32, i32
  }
  func.func @transform_1(%arg0: i32) -> (i32, i32) {
    %c0_i32 = arith.constant 0 : i32
    %c0_i32_0 = arith.constant 0 : i32
    return %arg0, %c0_i32 : i32, i32
  }
}

</mosaic_0001>

<llo_original>
// kernel: tpu_custom_call.1
$region0: #{tpu_custom_call.1}
  #allocation0 [shape = 'u32[]', space=smem, size = 0x4, offset = 0x4, fixed_abs, tag = 'smem constant byte address 0x4 - core index']
  #allocation1 [shape = 'u32[144,128]{1,0:T(1,128)}', space=vmem, size = 0x12000, scoped, tag = 'internal scratch']
  %s0 = inlined_call_operand.hbm [shape: f32[16,128], index: 0, kind: input, shape index: {}]
  %s1 = inlined_call_operand.hbm [shape: f32[16,128], index: 1, kind: output, shape index: {}]
  %s2 = sld [smem:[#allocation0]]
  $region18: #{tpu_custom_call.1} parent=0
    _
  %s4 = ssub.s32 1, %s2
  %s5 = scalar_select 0, %s4, %s2
  $region1: #{tpu_custom_call.1} parent=0
    #allocation2 [shape = 'u8[8192]{0}', space=vmem, size = 0x2000, scoped, tag = 'input window, operand 0, single buffered']
    #allocation3 [shape = 's32[1]{0}', space=sflag, size = 0x4, scoped, tag = 'scoped memory for tpu_custom_call.1']
    #allocation4 [shape = 's32[1]{0}', space=sflag, size = 0x4, scoped, tag = 'scoped memory for tpu_custom_call.1']
    #allocation5 [shape = 'u8[8192]{0}', space=vmem, size = 0x2000, scoped, tag = 'output window, operand 0, single buffered']
    %6 = vsyncpa [#allocation3], 0
    %7 = vsyncpa [#allocation4], 0
    // Predicated region
    $region2: #{tpu_custom_call.1} parent=1 // pred_check
      _
    $region3: #{tpu_custom_call.1} parent=1 // pred_check_branch
      %9 = sbr.rel (0) target = $region5
    $region4: #{tpu_custom_call.1} parent=1 // pred_region
      %s11 = ssub.s32 256, 256
      %12 = vsyncadd [#allocation3], %s11
      %s13 = sshll.u32 [#allocation2], 4
      %s14 = int_to_ptr.vmem [resolvable:$true] %s13
      %19 = dma.hbm_to_vmem [thread:$0]  %s0, 256, %s14, [#allocation3], 128, 128, 8
    $region5: #{tpu_custom_call.1} parent=1 // pred_fallthru
      _
    // Predicated region
    $region6: #{tpu_custom_call.1} parent=1 // pred_check
      _
    $region7: #{tpu_custom_call.1} parent=1 // pred_check_branch
      %21 = sbr.rel (0) target = $region9
    $region8: #{tpu_custom_call.1} parent=1 // pred_region
      %22 = dma.done [#allocation3], 256
    $region9: #{tpu_custom_call.1} parent=1 // pred_fallthru
      _
    %v23 = vld [vmem:[#allocation2] sm:$0xff]
    %v24 = vld [vmem:[#allocation2 + $0x8] sm:$0xff]
    %25 = vst [vmem:[#allocation5] sm:$0xff] %v23
    %26 = vst [vmem:[#allocation5 + $0x8] sm:$0xff] %v24
    // Predicated region
    $region10: #{tpu_custom_call.1} parent=1 // pred_check
      _
    $region11: #{tpu_custom_call.1} parent=1 // pred_check_branch
      %28 = sbr.rel (0) target = $region13
    $region12: #{tpu_custom_call.1} parent=1 // pred_region
      %s30 = ssub.s32 256, 256
      %31 = vsyncadd [#allocation4], %s30
      %s32 = sshll.u32 [#allocation5], 4
      %s33 = int_to_ptr.vmem [resolvable:$true] %s32
      %38 = dma.vmem_to_hbm [thread:$0]  %s33, 256, %s1, [#allocation4], 128, 128, 8
    $region13: #{tpu_custom_call.1} parent=1 // pred_fallthru
      _
    // Predicated region
    $region14: #{tpu_custom_call.1} parent=1 // pred_check
      _
    $region15: #{tpu_custom_call.1} parent=1 // pred_check_branch
      %40 = sbr.rel (0) target = $region17
    $region16: #{tpu_custom_call.1} parent=1 // pred_region
      %41 = dma.done [#allocation4], 256
    $region17: #{tpu_custom_call.1} parent=1 // pred_fallthru
      _
    %42 = vsyncpa [#allocation3], 1
    %43 = vsyncpa [#allocation4], 1

</llo_original>
